<compile_context>
chip_gen: v5e
topology: v5e:2x2
jax: 0.10.0
libtpu: 0.0.40
codegen_flags: <defaults>
</compile_context>

<pallas_src>
import functools
import math

import jax
import jax.numpy as jnp
import numpy as np
from jax import lax
from jax.experimental import pallas as pl
from jax.experimental.pallas import tpu as pltpu

_LANE = 128
_SUBLANE = 8


# ---------------------------------------------------------------------------
# Kernel
# ---------------------------------------------------------------------------
def _precision_recall_kernel(s_ref, score_ref, out_ref, *, consts, n_strips):
    """Accumulates [tp_0..tp_{T-1}, (tp+fp)_0..(tp+fp)_{T-1}, sum(w*trues)].

    s_ref     : (TR, W) f32 signed weights: +w positive, -w negative, 0 ignore/pad.
    score_ref : (TR, W) f32 per-anchor scores (logits or probabilities).
    out_ref   : (1, 2T+1, 8, 128) f32 per-core accumulator block; resident across
                the reduction axis (grid axis 1), distinct per core (grid axis 0).
    """
    T = len(consts)
    W = score_ref.shape[1]
    n_chunks = W // _LANE

    @pl.when(pl.program_id(1) == 0)
    def _init():
        out_ref[...] = jnp.zeros(out_ref.shape, out_ref.dtype)

    def strip_body(k, accs):
        accs = list(accs)
        r0 = pl.multiple_of(k * _SUBLANE, _SUBLANE)
        s = s_ref[pl.ds(r0, _SUBLANE), :]        # (8, W) signed weights
        p = score_ref[pl.ds(r0, _SUBLANE), :]    # (8, W) scores
        wt = jnp.maximum(s, 0.0)                 # w * trues
        wv = jnp.abs(s)                          # w * (trues | falses)

        # Threshold-independent: sum(w * trues) == tp + fn for every threshold.
        rec = accs[2 * T]
        for c in range(n_chunks):
            rec = rec + wt[:, c * _LANE:(c + 1) * _LANE]
        accs[2 * T] = rec

        for t in range(T):
            pred = p > consts[t]
            tp, cnt = accs[t], accs[T + t]
            for c in range(n_chunks):
                sl = slice(c * _LANE, (c + 1) * _LANE)
                pc = pred[:, sl]
                tp = tp + jnp.where(pc, wt[:, sl], 0.0)     # tp_t
                cnt = cnt + jnp.where(pc, wv[:, sl], 0.0)   # tp_t + fp_t
            accs[t], accs[T + t] = tp, cnt
        return tuple(accs)

    init = tuple(jnp.zeros((_SUBLANE, _LANE), jnp.float32)
                 for _ in range(2 * T + 1))
    totals = lax.fori_loop(0, n_strips, strip_body, init)

    for q in range(2 * T + 1):
        out_ref[0, q] += totals[q]


# ---------------------------------------------------------------------------
# Layout helpers
# ---------------------------------------------------------------------------
def _logit_or_inf(t):
    """sigmoid(x) > t  <=>  x > logit(t); degenerate thresholds guarded."""
    if t <= 0.0:
        return float("-inf")
    if t >= 1.0:
        return float("inf")
    return math.log(t / (1.0 - t))


def _choose_layout(n):
    """Pick lane width W, tile rows, grid split, and whether scores need padding."""
    # Prefer the widest lane width (<= 1024) that divides n: the dominant f32
    # score stream then reshapes for free (no HBM padding copy).
    w = None
    for u in range(8, 0, -1):
        if n % (_LANE * u) == 0:
            w = _LANE * u
            break
    pad_scores = w is None
    if w is None:
        w = _LANE * 8
    rows = -(-n // w)
    # ~2 MiB of f32 per stream per grid step (amortizes ~0.35us/step overhead).
    tr_target = max(_SUBLANE,
                    ((2 * 1024 * 1024) // (w * 4)) // _SUBLANE * _SUBLANE)
    tile_rows = max(_SUBLANE, min(tr_target, -(-rows // _SUBLANE) * _SUBLANE))
    steps = -(-rows // tile_rows)
    # v7x megacore: split the row tiles across both TensorCores when the step
    # count divides evenly (keeps every score block at least partially in
    # bounds).  On v5e/v6e the parallel axis simply iterates -- harmless.
    cores = 2 if (steps >= 2 and steps % 2 == 0) else 1
    steps_per_core = steps // cores
    rows_pad = steps * tile_rows
    return w, tile_rows, rows_pad, cores, steps_per_core, pad_scores


# ---------------------------------------------------------------------------
# Module-equivalent wrapper
# ---------------------------------------------------------------------------
class PrecisionRecall:
    """JAX/Pallas port of the PyTorch `PrecisionRecall` metric module."""

    def __init__(self, dim=1, ignore_idx=-1, thresholds=0.5,
                 use_sigmoid_score=False, encode_background_as_zeros=True):
        if not isinstance(thresholds, (list, tuple)):
            thresholds = [thresholds]
        n = len(thresholds)
        self.prec_total = jnp.zeros((n,), jnp.float32)
        self.prec_count = jnp.zeros((n,), jnp.float32)
        self.rec_total = jnp.zeros((n,), jnp.float32)
        self.rec_count = jnp.zeros((n,), jnp.float32)
        self._ignore_idx = ignore_idx
        self._dim = dim  # kept for API parity (the torch forward never uses it)
        self._thresholds = list(thresholds)
        self._use_sigmoid_score = use_sigmoid_score
        self._encode_background_as_zeros = encode_background_as_zeros

    # -- forward -----------------------------------------------------------
    def forward(self, labels, preds, weights=None):
        labels = jnp.asarray(labels)
        preds = jnp.asarray(preds)
        num_classes = preds.shape[-1]
        assert int(np.prod(preds.shape[:-1])) == int(np.prod(labels.shape))

        # --- per-anchor score + threshold constants (mirrors torch forward) ---
        if self._encode_background_as_zeros:
            assert self._use_sigmoid_score is True
            scores = jnp.max(preds, axis=-1)                  # logit space
            consts = tuple(_logit_or_inf(float(t)) for t in self._thresholds)
        elif self._use_sigmoid_score:
            if num_classes > 1:
                scores = jnp.max(preds[..., 1:], axis=-1)     # logit space
            else:  # degenerate: no foreground classes -> never predicts positive
                scores = jnp.full(preds.shape[:-1], -jnp.inf, jnp.float32)
            consts = tuple(_logit_or_inf(float(t)) for t in self._thresholds)
        else:
            if num_classes > 1:
                probs = jax.nn.softmax(preds, axis=-1)[..., 1:]
                scores = jnp.max(probs, axis=-1)              # probability space
            else:
                scores = jnp.full(preds.shape[:-1], -jnp.inf, jnp.float32)
            consts = tuple(float(t) for t in self._thresholds)
        score_flat = scores.reshape(-1).astype(jnp.float32)

        # --- signed weight stream: +w positive, -w negative, 0 ignore ---------
        lab_flat = labels.reshape(-1)
        n = int(lab_flat.shape[0])
        if weights is None:
            valid = lab_flat != self._ignore_idx
            s_flat = jnp.where(valid & (lab_flat > 0), 1.0,
                               jnp.where(valid & (lab_flat == 0), -1.0, 0.0))
        else:
            # torch semantics: user weights fully replace the ignore mask.
            w = jnp.broadcast_to(jnp.asarray(weights), labels.shape)
            w = w.reshape(-1).astype(jnp.float32)
            s_flat = jnp.where(lab_flat > 0, w,
                               jnp.where(lab_flat == 0, -w, 0.0))
        s_flat = s_flat.astype(jnp.float32)

        # --- layout -----------------------------------------------------------
        W, tile_rows, rows_pad, cores, spc, pad_scores = _choose_layout(n)
        total_pad = rows_pad * W

        # All padding (ignore = 0) is absorbed by the signed-weight stream: the
        # pad fuses into its construction pass, so the big score stream is never
        # re-copied when W divides n.
        if total_pad > n:
            s_flat = jnp.pad(s_flat, (0, total_pad - n))
        s_grid = s_flat.reshape(rows_pad, W)

        if pad_scores:
            rows_score = -(-n // W)
            score_flat = jnp.pad(score_flat, (0, rows_score * W - n))
            score_grid = score_flat.reshape(rows_score, W)
        else:
            score_grid = score_flat.reshape(n // W, W)   # free reshape, no copy

        T = len(consts)
        tile_bytes = tile_rows * W * 4
        # 2 f32 streams x 2 pipeline buffers + accumulator/output + headroom.
        vmem_limit = int(min(32 << 20, 2 * 2 * tile_bytes + (4 << 20)))

        kernel = functools.partial(_precision_recall_kernel, consts=consts,
                                   n_strips=tile_rows // _SUBLANE)
        out = pl.pallas_call(
            kernel,
            out_shape=jax.ShapeDtypeStruct((cores, 2 * T + 1, _SUBLANE, _LANE),
                                           jnp.float32),
            grid=(cores, spc),
            in_specs=[
                pl.BlockSpec((tile_rows, W), lambda c, i: (c * spc + i, 0)),
                pl.BlockSpec((tile_rows, W), lambda c, i: (c * spc + i, 0)),
            ],
            out_specs=pl.BlockSpec((1, 2 * T + 1, _SUBLANE, _LANE),
                                   lambda c, i: (c, 0, 0, 0)),
            compiler_params=pltpu.CompilerParams(
                dimension_semantics=("parallel", "arbitrary"),
                vmem_limit_bytes=vmem_limit,
            ),
        )(s_grid, score_grid)

        sums = jnp.sum(out, axis=(0, 2, 3))                    # (2T+1,)
        tp = sums[:T]
        prec_count = sums[T:2 * T]                             # tp + fp
        rec_count = jnp.broadcast_to(sums[2 * T], (T,))        # tp + fn (all t)

        rec_ok = rec_count > 0
        prec_ok = prec_count > 0
        self.rec_count = self.rec_count + jnp.where(rec_ok, rec_count, 0.0)
        self.rec_total = self.rec_total + jnp.where(rec_ok, tp, 0.0)
        self.prec_count = self.prec_count + jnp.where(prec_ok, prec_count, 0.0)
        self.prec_total = self.prec_total + jnp.where(prec_ok, tp, 0.0)
        return self.value

    __call__ = forward

    # -- torch-buffer-style API ---------------------------------------------
    @property
    def value(self):
        prec_count = jnp.maximum(self.prec_count, 1.0)
        rec_count = jnp.maximum(self.rec_count, 1.0)
        return self.prec_total / prec_count, self.rec_total / rec_count

    @property
    def thresholds(self):
        return self._thresholds

    def clear(self):
        n = len(self._thresholds)
        self.prec_total = jnp.zeros((n,), jnp.float32)
        self.prec_count = jnp.zeros((n,), jnp.float32)
        self.rec_total = jnp.zeros((n,), jnp.float32)
        self.rec_count = jnp.zeros((n,), jnp.float32)


# ---------------------------------------------------------------------------
# Pure-JAX reference (line-by-line port of the torch module) for verification
# ---------------------------------------------------------------------------
class _ReferencePrecisionRecall:
    def __init__(self, dim=1, ignore_idx=-1, thresholds=0.5,
                 use_sigmoid_score=False, encode_background_as_zeros=True):
        if not isinstance(thresholds, (list, tuple)):
            thresholds = [thresholds]
        n = len(thresholds)
        self.prec_total = jnp.zeros((n,), jnp.float32)
        self.prec_count = jnp.zeros((n,), jnp.float32)
        self.rec_total = jnp.zeros((n,), jnp.float32)
        self.rec_count = jnp.zeros((n,), jnp.float32)
        self._ignore_idx = ignore_idx
        self._thresholds = list(thresholds)
        self._use_sigmoid_score = use_sigmoid_score
        self._encode_background_as_zeros = encode_background_as_zeros

    def forward(self, labels, preds, weights=None):
        if self._encode_background_as_zeros:
            assert self._use_sigmoid_score is True
            total_scores = jax.nn.sigmoid(preds)
        elif self._use_sigmoid_score:
            total_scores = jax.nn.sigmoid(preds)[..., 1:]
        else:
            total_scores = jax.nn.softmax(preds, axis=-1)[..., 1:]
        scores = jnp.max(total_scores, axis=-1)
        if weights is None:
            w = (labels != self._ignore_idx).astype(jnp.float32)
        else:
            w = jnp.asarray(weights).astype(jnp.float32)
        n = labels.shape[0]
        lab = labels.reshape(n, -1)
        sc = scores.reshape(n, -1)
        w = jnp.broadcast_to(w, labels.shape).reshape(n, -1)
        for i, th in enumerate(self._thresholds):
            pred_true = sc > th
            trues = lab > 0
            falses = lab == 0
            tp = jnp.sum(w * (trues & pred_true).astype(jnp.float32))
            fp = jnp.sum(w * (falses & pred_true).astype(jnp.float32))
            fn = jnp.sum(w * (trues & jnp.logical_not(pred_true)).astype(jnp.float32))
            rec_count = tp + fn
            prec_count = tp + fp
            if float(rec_count) > 0:
                self.rec_count = self.rec_count.at[i].add(rec_count)
                self.rec_total = self.rec_total.at[i].add(tp)
            if float(prec_count) > 0:
                self.prec_count = self.prec_count.at[i].add(prec_count)
                self.prec_total = self.prec_total.at[i].add(tp)
        return (self.prec_total / jnp.maximum(self.prec_count, 1.0),
                self.rec_total / jnp.maximum(self.rec_count, 1.0))


# ---------------------------------------------------------------------------
# Demo / correctness check
# ---------------------------------------------------------------------------
if __name__ == "__main__":
    key = jax.random.PRNGKey(0)
    k1, k2, k3, k4, k5 = jax.random.split(key, 5)

    N, A, C = 2, 256, 2
    labels = jax.random.randint(k1, (N, A), minval=-1, maxval=3, dtype=jnp.int32)
    preds = jax.random.normal(k2, (N, A, C), dtype=jnp.float32)
    weights = jax.random.uniform(k3, (N, A), dtype=jnp.float32)

    # Sigmoid / encode_background_as_zeros path; two thresholds; unweighted then
    # weighted call with cross-call buffer accumulation.
    metric = PrecisionRecall(thresholds=[0.35, 0.6], use_sigmoid_score=True,
                             encode_background_as_zeros=True)
    oracle = _ReferencePrecisionRecall(thresholds=[0.35, 0.6],
                                       use_sigmoid_score=True,
                                       encode_background_as_zeros=True)

    p1, r1 = metric.forward(labels, preds)
    p1r, r1r = oracle.forward(labels, preds)
    p2, r2 = metric.forward(labels, preds, weights)
    p2r, r2r = oracle.forward(labels, preds, weights)
    jax.block_until_ready((p2, r2))

    np.testing.assert_allclose(np.asarray(p1), np.asarray(p1r), rtol=1e-4, atol=1e-5)
    np.testing.assert_allclose(np.asarray(r1), np.asarray(r1r), rtol=1e-4, atol=1e-5)
    np.testing.assert_allclose(np.asarray(p2), np.asarray(p2r), rtol=1e-4, atol=1e-5)
    np.testing.assert_allclose(np.asarray(r2), np.asarray(r2r), rtol=1e-4, atol=1e-5)

    # Softmax fallback path (probability-space thresholds, wrapper-computed max).
    C3 = 3
    labels3 = jax.random.randint(k4, (N, A), minval=-1, maxval=3, dtype=jnp.int32)
    preds3 = jax.random.normal(k5, (N, A, C3), dtype=jnp.float32)
    metric3 = PrecisionRecall(thresholds=0.4, use_sigmoid_score=False,
                              encode_background_as_zeros=False)
    oracle3 = _ReferencePrecisionRecall(thresholds=0.4, use_sigmoid_score=False,
                                        encode_background_as_zeros=False)
    p3, r3 = metric3.forward(labels3, preds3)
    p3r, r3r = oracle3.forward(labels3, preds3)
    jax.block_until_ready((p3, r3))
    np.testing.assert_allclose(np.asarray(p3), np.asarray(p3r), rtol=1e-4, atol=1e-5)
    np.testing.assert_allclose(np.asarray(r3), np.asarray(r3r), rtol=1e-4, atol=1e-5)

    print("KERNEL_OK")
</pallas_src>

<mosaic_0001>
module attributes {stable_mosaic.version = 11 : i64} {
  func.func @_precision_recall_kernel(%arg0: i32, %arg1: i32, %arg2: memref<8x512xf32, #tpu.memory_space<vmem>>, %arg3: memref<8x512xf32, #tpu.memory_space<vmem>>, %arg4: memref<1x5x8x128xf32, #tpu.memory_space<vmem>>) attributes {dimension_semantics = [#tpu.dimension_semantics<parallel>, #tpu.dimension_semantics<arbitrary>], iteration_bounds = array<i64: 1, 1>, scalar_prefetch = 0 : i64, scratch_operands = 0 : i64, tpu.core_type = #tpu.core_type<tc>, window_params = [{transform_indices = @transform_0, window_bounds = array<i64: 8, 512>}, {transform_indices = @transform_1, window_bounds = array<i64: 8, 512>}, {transform_indices = @transform_2, window_bounds = array<i64: 1, 5, 8, 128>}]} {
    %c0_i32 = arith.constant 0 : i32
    %0 = arith.cmpi eq, %arg1, %c0_i32 : i32
    %1 = arith.extui %0 : i1 to i32
    %c0_i32_0 = arith.constant 0 : i32
    %2 = arith.cmpi ne, %1, %c0_i32_0 : i32
    scf.if %2 {
      %cst_62 = arith.constant 0.000000e+00 : f32
      %131 = vector.broadcast %cst_62 : f32 to vector<1x5x8x128xf32>
      %c0_63 = arith.constant 0 : index
      %c0_64 = arith.constant 0 : index
      %c0_65 = arith.constant 0 : index
      %c0_66 = arith.constant 0 : index
      %132 = vector.load %arg4[%c0_63, %c0_64, %c0_65, %c0_66] : memref<1x5x8x128xf32, #tpu.memory_space<vmem>>, vector<1x5x8x128xf32>
      tpu.vector_store %arg4[%c0_63, %c0_64, %c0_65, %c0_66], %131 {strides = array<i32>} : memref<1x5x8x128xf32, #tpu.memory_space<vmem>>, vector<1x5x8x128xf32>,
    } else {
    }
    %cst = arith.constant 0.000000e+00 : f32
    %3 = vector.broadcast %cst : f32 to vector<8x128xf32>
    %cst_1 = arith.constant 0.000000e+00 : f32
    %4 = vector.broadcast %cst_1 : f32 to vector<8x128xf32>
    %cst_2 = arith.constant 0.000000e+00 : f32
    %5 = vector.broadcast %cst_2 : f32 to vector<8x128xf32>
    %cst_3 = arith.constant 0.000000e+00 : f32
    %6 = vector.broadcast %cst_3 : f32 to vector<8x128xf32>
    %cst_4 = arith.constant 0.000000e+00 : f32
    %7 = vector.broadcast %cst_4 : f32 to vector<8x128xf32>
    %c0_i32_5 = arith.constant 0 : i32
    %c8_i32 = arith.constant 8 : i32
    %8 = arith.muli %c0_i32_5, %c8_i32 : i32
    %9 = tpu.assume_multiple %8, 8 : i32
    %10 = arith.index_cast %9 : i32 to index
    %c0 = arith.constant 0 : index
    %11 = vector.load %arg2[%10, %c0] : memref<8x512xf32, #tpu.memory_space<vmem>>, vector<8x512xf32>
    %12 = arith.index_cast %9 : i32 to index
    %c0_6 = arith.constant 0 : index
    %13 = vector.load %arg3[%12, %c0_6] : memref<8x512xf32, #tpu.memory_space<vmem>>, vector<8x512xf32>
    %cst_7 = arith.constant 0.000000e+00 : f32
    %14 = vector.broadcast %cst_7 : f32 to vector<8x512xf32>
    %15 = arith.maximumf %11, %14 : vector<8x512xf32>
    %16 = math.absf %11 : vector<8x512xf32>
    %17 = vector.extract_strided_slice %15 {offsets = [0, 0], sizes = [8, 128], strides = [1, 1]} : vector<8x512xf32> to vector<8x128xf32>
    %18 = arith.addf %7, %17 : vector<8x128xf32>
    %19 = vector.extract_strided_slice %15 {offsets = [0, 128], sizes = [8, 128], strides = [1, 1]} : vector<8x512xf32> to vector<8x128xf32>
    %20 = arith.addf %18, %19 : vector<8x128xf32>
    %21 = vector.extract_strided_slice %15 {offsets = [0, 256], sizes = [8, 128], strides = [1, 1]} : vector<8x512xf32> to vector<8x128xf32>
    %22 = arith.addf %20, %21 : vector<8x128xf32>
    %23 = vector.extract_strided_slice %15 {offsets = [0, 384], sizes = [8, 128], strides = [1, 1]} : vector<8x512xf32> to vector<8x128xf32>
    %24 = arith.addf %22, %23 : vector<8x128xf32>
    %cst_8 = arith.constant -0.619039237 : f32
    %25 = vector.broadcast %cst_8 : f32 to vector<8x512xf32>
    %26 = arith.cmpf ogt, %13, %25 : vector<8x512xf32>
    %27 = vector.extract_strided_slice %26 {offsets = [0, 0], sizes = [8, 128], strides = [1, 1]} : vector<8x512xi1> to vector<8x128xi1>
    %28 = vector.extract_strided_slice %15 {offsets = [0, 0], sizes = [8, 128], strides = [1, 1]} : vector<8x512xf32> to vector<8x128xf32>
    %cst_9 = arith.constant 0.000000e+00 : f32
    %29 = vector.broadcast %cst_9 : f32 to vector<8x128xf32>
    %30 = arith.select %27, %28, %29 : vector<8x128xi1>, vector<8x128xf32>
    %31 = arith.addf %3, %30 : vector<8x128xf32>
    %32 = vector.extract_strided_slice %16 {offsets = [0, 0], sizes = [8, 128], strides = [1, 1]} : vector<8x512xf32> to vector<8x128xf32>
    %cst_10 = arith.constant 0.000000e+00 : f32
    %33 = vector.broadcast %cst_10 : f32 to vector<8x128xf32>
    %34 = arith.select %27, %32, %33 : vector<8x128xi1>, vector<8x128xf32>
    %35 = arith.addf %5, %34 : vector<8x128xf32>
    %36 = vector.extract_strided_slice %26 {offsets = [0, 128], sizes = [8, 128], strides = [1, 1]} : vector<8x512xi1> to vector<8x128xi1>
    %37 = vector.extract_strided_slice %15 {offsets = [0, 128], sizes = [8, 128], strides = [1, 1]} : vector<8x512xf32> to vector<8x128xf32>
    %cst_11 = arith.constant 0.000000e+00 : f32
    %38 = vector.broadcast %cst_11 : f32 to vector<8x128xf32>
    %39 = arith.select %36, %37, %38 : vector<8x128xi1>, vector<8x128xf32>
    %40 = arith.addf %31, %39 : vector<8x128xf32>
    %41 = vector.extract_strided_slice %16 {offsets = [0, 128], sizes = [8, 128], strides = [1, 1]} : vector<8x512xf32> to vector<8x128xf32>
    %cst_12 = arith.constant 0.000000e+00 : f32
    %42 = vector.broadcast %cst_12 : f32 to vector<8x128xf32>
    %43 = arith.select %36, %41, %42 : vector<8x128xi1>, vector<8x128xf32>
    %44 = arith.addf %35, %43 : vector<8x128xf32>
    %45 = vector.extract_strided_slice %26 {offsets = [0, 256], sizes = [8, 128], strides = [1, 1]} : vector<8x512xi1> to vector<8x128xi1>
    %46 = vector.extract_strided_slice %15 {offsets = [0, 256], sizes = [8, 128], strides = [1, 1]} : vector<8x512xf32> to vector<8x128xf32>
    %cst_13 = arith.constant 0.000000e+00 : f32
    %47 = vector.broadcast %cst_13 : f32 to vector<8x128xf32>
    %48 = arith.select %45, %46, %47 : vector<8x128xi1>, vector<8x128xf32>
    %49 = arith.addf %40, %48 : vector<8x128xf32>
    %50 = vector.extract_strided_slice %16 {offsets = [0, 256], sizes = [8, 128], strides = [1, 1]} : vector<8x512xf32> to vector<8x128xf32>
    %cst_14 = arith.constant 0.000000e+00 : f32
    %51 = vector.broadcast %cst_14 : f32 to vector<8x128xf32>
    %52 = arith.select %45, %50, %51 : vector<8x128xi1>, vector<8x128xf32>
    %53 = arith.addf %44, %52 : vector<8x128xf32>
    %54 = vector.extract_strided_slice %26 {offsets = [0, 384], sizes = [8, 128], strides = [1, 1]} : vector<8x512xi1> to vector<8x128xi1>
    %55 = vector.extract_strided_slice %15 {offsets = [0, 384], sizes = [8, 128], strides = [1, 1]} : vector<8x512xf32> to vector<8x128xf32>
    %cst_15 = arith.constant 0.000000e+00 : f32
    %56 = vector.broadcast %cst_15 : f32 to vector<8x128xf32>
    %57 = arith.select %54, %55, %56 : vector<8x128xi1>, vector<8x128xf32>
    %58 = arith.addf %49, %57 : vector<8x128xf32>
    %59 = vector.extract_strided_slice %16 {offsets = [0, 384], sizes = [8, 128], strides = [1, 1]} : vector<8x512xf32> to vector<8x128xf32>
    %cst_16 = arith.constant 0.000000e+00 : f32
    %60 = vector.broadcast %cst_16 : f32 to vector<8x128xf32>
    %61 = arith.select %54, %59, %60 : vector<8x128xi1>, vector<8x128xf32>
    %62 = arith.addf %53, %61 : vector<8x128xf32>
    %cst_17 = arith.constant 0.405465096 : f32
    %63 = vector.broadcast %cst_17 : f32 to vector<8x512xf32>
    %64 = arith.cmpf ogt, %13, %63 : vector<8x512xf32>
    %65 = vector.extract_strided_slice %64 {offsets = [0, 0], sizes = [8, 128], strides = [1, 1]} : vector<8x512xi1> to vector<8x128xi1>
    %66 = vector.extract_strided_slice %15 {offsets = [0, 0], sizes = [8, 128], strides = [1, 1]} : vector<8x512xf32> to vector<8x128xf32>
    %cst_18 = arith.constant 0.000000e+00 : f32
    %67 = vector.broadcast %cst_18 : f32 to vector<8x128xf32>
    %68 = arith.select %65, %66, %67 : vector<8x128xi1>, vector<8x128xf32>
    %69 = arith.addf %4, %68 : vector<8x128xf32>
    %70 = vector.extract_strided_slice %16 {offsets = [0, 0], sizes = [8, 128], strides = [1, 1]} : vector<8x512xf32> to vector<8x128xf32>
    %cst_19 = arith.constant 0.000000e+00 : f32
    %71 = vector.broadcast %cst_19 : f32 to vector<8x128xf32>
    %72 = arith.select %65, %70, %71 : vector<8x128xi1>, vector<8x128xf32>
    %73 = arith.addf %6, %72 : vector<8x128xf32>
    %74 = vector.extract_strided_slice %64 {offsets = [0, 128], sizes = [8, 128], strides = [1, 1]} : vector<8x512xi1> to vector<8x128xi1>
    %75 = vector.extract_strided_slice %15 {offsets = [0, 128], sizes = [8, 128], strides = [1, 1]} : vector<8x512xf32> to vector<8x128xf32>
    %cst_20 = arith.constant 0.000000e+00 : f32
    %76 = vector.broadcast %cst_20 : f32 to vector<8x128xf32>
    %77 = arith.select %74, %75, %76 : vector<8x128xi1>, vector<8x128xf32>
    %78 = arith.addf %69, %77 : vector<8x128xf32>
    %79 = vector.extract_strided_slice %16 {offsets = [0, 128], sizes = [8, 128], strides = [1, 1]} : vector<8x512xf32> to vector<8x128xf32>
    %cst_21 = arith.constant 0.000000e+00 : f32
    %80 = vector.broadcast %cst_21 : f32 to vector<8x128xf32>
    %81 = arith.select %74, %79, %80 : vector<8x128xi1>, vector<8x128xf32>
    %82 = arith.addf %73, %81 : vector<8x128xf32>
    %83 = vector.extract_strided_slice %64 {offsets = [0, 256], sizes = [8, 128], strides = [1, 1]} : vector<8x512xi1> to vector<8x128xi1>
    %84 = vector.extract_strided_slice %15 {offsets = [0, 256], sizes = [8, 128], strides = [1, 1]} : vector<8x512xf32> to vector<8x128xf32>
    %cst_22 = arith.constant 0.000000e+00 : f32
    %85 = vector.broadcast %cst_22 : f32 to vector<8x128xf32>
    %86 = arith.select %83, %84, %85 : vector<8x128xi1>, vector<8x128xf32>
    %87 = arith.addf %78, %86 : vector<8x128xf32>
    %88 = vector.extract_strided_slice %16 {offsets = [0, 256], sizes = [8, 128], strides = [1, 1]} : vector<8x512xf32> to vector<8x128xf32>
    %cst_23 = arith.constant 0.000000e+00 : f32
    %89 = vector.broadcast %cst_23 : f32 to vector<8x128xf32>
    %90 = arith.select %83, %88, %89 : vector<8x128xi1>, vector<8x128xf32>
    %91 = arith.addf %82, %90 : vector<8x128xf32>
    %92 = vector.extract_strided_slice %64 {offsets = [0, 384], sizes = [8, 128], strides = [1, 1]} : vector<8x512xi1> to vector<8x128xi1>
    %93 = vector.extract_strided_slice %15 {offsets = [0, 384], sizes = [8, 128], strides = [1, 1]} : vector<8x512xf32> to vector<8x128xf32>
    %cst_24 = arith.constant 0.000000e+00 : f32
    %94 = vector.broadcast %cst_24 : f32 to vector<8x128xf32>
    %95 = arith.select %92, %93, %94 : vector<8x128xi1>, vector<8x128xf32>
    %96 = arith.addf %87, %95 : vector<8x128xf32>
    %97 = vector.extract_strided_slice %16 {offsets = [0, 384], sizes = [8, 128], strides = [1, 1]} : vector<8x512xf32> to vector<8x128xf32>
    %cst_25 = arith.constant 0.000000e+00 : f32
    %98 = vector.broadcast %cst_25 : f32 to vector<8x128xf32>
    %99 = arith.select %92, %97, %98 : vector<8x128xi1>, vector<8x128xf32>
    %100 = arith.addf %91, %99 : vector<8x128xf32>
    %c1_i32 = arith.constant 1 : i32
    %c0_26 = arith.constant 0 : index
    %c0_27 = arith.constant 0 : index
    %c0_28 = arith.constant 0 : index
    %c0_29 = arith.constant 0 : index
    %101 = vector.load %arg4[%c0_26, %c0_27, %c0_28, %c0_29] : memref<1x5x8x128xf32, #tpu.memory_space<vmem>>, vector<1x1x8x128xf32>
    %102 = vector.shape_cast %101 : vector<1x1x8x128xf32> to vector<8x128xf32>
    %103 = arith.addf %102, %58 : vector<8x128xf32>
    %c0_30 = arith.constant 0 : index
    %c0_31 = arith.constant 0 : index
    %c0_32 = arith.constant 0 : index
    %c0_33 = arith.constant 0 : index
    %104 = vector.load %arg4[%c0_30, %c0_31, %c0_32, %c0_33] : memref<1x5x8x128xf32, #tpu.memory_space<vmem>>, vector<1x1x8x128xf32>
    %105 = vector.shape_cast %104 : vector<1x1x8x128xf32> to vector<8x128xf32>
    %106 = vector.shape_cast %103 : vector<8x128xf32> to vector<1x1x8x128xf32>
    tpu.vector_store %arg4[%c0_30, %c0_31, %c0_32, %c0_33], %106 {strides = array<i32>} : memref<1x5x8x128xf32, #tpu.memory_space<vmem>>, vector<1x1x8x128xf32>,
    %c0_34 = arith.constant 0 : index
    %c1 = arith.constant 1 : index
    %c0_35 = arith.constant 0 : index
    %c0_36 = arith.constant 0 : index
    %107 = vector.load %arg4[%c0_34, %c1, %c0_35, %c0_36] : memref<1x5x8x128xf32, #tpu.memory_space<vmem>>, vector<1x1x8x128xf32>
    %108 = vector.shape_cast %107 : vector<1x1x8x128xf32> to vector<8x128xf32>
    %109 = arith.addf %108, %96 : vector<8x128xf32>
    %c0_37 = arith.constant 0 : index
    %c1_38 = arith.constant 1 : index
    %c0_39 = arith.constant 0 : index
    %c0_40 = arith.constant 0 : index
    %110 = vector.load %arg4[%c0_37, %c1_38, %c0_39, %c0_40] : memref<1x5x8x128xf32, #tpu.memory_space<vmem>>, vector<1x1x8x128xf32>
    %111 = vector.shape_cast %110 : vector<1x1x8x128xf32> to vector<8x128xf32>
    %112 = vector.shape_cast %109 : vector<8x128xf32> to vector<1x1x8x128xf32>
    tpu.vector_store %arg4[%c0_37, %c1_38, %c0_39, %c0_40], %112 {strides = array<i32>} : memref<1x5x8x128xf32, #tpu.memory_space<vmem>>, vector<1x1x8x128xf32>,
    %c0_41 = arith.constant 0 : index
    %c2 = arith.constant 2 : index
    %c0_42 = arith.constant 0 : index
    %c0_43 = arith.constant 0 : index
    %113 = vector.load %arg4[%c0_41, %c2, %c0_42, %c0_43] : memref<1x5x8x128xf32, #tpu.memory_space<vmem>>, vector<1x1x8x128xf32>
    %114 = vector.shape_cast %113 : vector<1x1x8x128xf32> to vector<8x128xf32>
    %115 = arith.addf %114, %62 : vector<8x128xf32>
    %c0_44 = arith.constant 0 : index
    %c2_45 = arith.constant 2 : index
    %c0_46 = arith.constant 0 : index
    %c0_47 = arith.constant 0 : index
    %116 = vector.load %arg4[%c0_44, %c2_45, %c0_46, %c0_47] : memref<1x5x8x128xf32, #tpu.memory_space<vmem>>, vector<1x1x8x128xf32>
    %117 = vector.shape_cast %116 : vector<1x1x8x128xf32> to vector<8x128xf32>
    %118 = vector.shape_cast %115 : vector<8x128xf32> to vector<1x1x8x128xf32>
    tpu.vector_store %arg4[%c0_44, %c2_45, %c0_46, %c0_47], %118 {strides = array<i32>} : memref<1x5x8x128xf32, #tpu.memory_space<vmem>>, vector<1x1x8x128xf32>,
    %c0_48 = arith.constant 0 : index
    %c3 = arith.constant 3 : index
    %c0_49 = arith.constant 0 : index
    %c0_50 = arith.constant 0 : index
    %119 = vector.load %arg4[%c0_48, %c3, %c0_49, %c0_50] : memref<1x5x8x128xf32, #tpu.memory_space<vmem>>, vector<1x1x8x128xf32>
    %120 = vector.shape_cast %119 : vector<1x1x8x128xf32> to vector<8x128xf32>
    %121 = arith.addf %120, %100 : vector<8x128xf32>
    %c0_51 = arith.constant 0 : index
    %c3_52 = arith.constant 3 : index
    %c0_53 = arith.constant 0 : index
    %c0_54 = arith.constant 0 : index
    %122 = vector.load %arg4[%c0_51, %c3_52, %c0_53, %c0_54] : memref<1x5x8x128xf32, #tpu.memory_space<vmem>>, vector<1x1x8x128xf32>
    %123 = vector.shape_cast %122 : vector<1x1x8x128xf32> to vector<8x128xf32>
    %124 = vector.shape_cast %121 : vector<8x128xf32> to vector<1x1x8x128xf32>
    tpu.vector_store %arg4[%c0_51, %c3_52, %c0_53, %c0_54], %124 {strides = array<i32>} : memref<1x5x8x128xf32, #tpu.memory_space<vmem>>, vector<1x1x8x128xf32>,
    %c0_55 = arith.constant 0 : index
    %c4 = arith.constant 4 : index
    %c0_56 = arith.constant 0 : index
    %c0_57 = arith.constant 0 : index
    %125 = vector.load %arg4[%c0_55, %c4, %c0_56, %c0_57] : memref<1x5x8x128xf32, #tpu.memory_space<vmem>>, vector<1x1x8x128xf32>
    %126 = vector.shape_cast %125 : vector<1x1x8x128xf32> to vector<8x128xf32>
    %127 = arith.addf %126, %24 : vector<8x128xf32>
    %c0_58 = arith.constant 0 : index
    %c4_59 = arith.constant 4 : index
    %c0_60 = arith.constant 0 : index
    %c0_61 = arith.constant 0 : index
    %128 = vector.load %arg4[%c0_58, %c4_59, %c0_60, %c0_61] : memref<1x5x8x128xf32, #tpu.memory_space<vmem>>, vector<1x1x8x128xf32>
    %129 = vector.shape_cast %128 : vector<1x1x8x128xf32> to vector<8x128xf32>
    %130 = vector.shape_cast %127 : vector<8x128xf32> to vector<1x1x8x128xf32>
    tpu.vector_store %arg4[%c0_58, %c4_59, %c0_60, %c0_61], %130 {strides = array<i32>} : memref<1x5x8x128xf32, #tpu.memory_space<vmem>>, vector<1x1x8x128xf32>,
    return
  }
  func.func @transform_0(%arg0: i32, %arg1: i32) -> (i32, i32) {
    %c1_i32 = arith.constant 1 : i32
    %0 = arith.muli %arg0, %c1_i32 : i32
    %1 = arith.addi %0, %arg1 : i32
    %c0_i32 = arith.constant 0 : i32
    %c0_i32_0 = arith.constant 0 : i32
    return %1, %c0_i32 : i32, i32
  }
  func.func @transform_1(%arg0: i32, %arg1: i32) -> (i32, i32) {
    %c1_i32 = arith.constant 1 : i32
    %0 = arith.muli %arg0, %c1_i32 : i32
    %1 = arith.addi %0, %arg1 : i32
    %c0_i32 = arith.constant 0 : i32
    %c0_i32_0 = arith.constant 0 : i32
    return %1, %c0_i32 : i32, i32
  }
  func.func @transform_2(%arg0: i32, %arg1: i32) -> (i32, i32, i32, i32) {
    %c0_i32 = arith.constant 0 : i32
    %c0_i32_0 = arith.constant 0 : i32
    %c0_i32_1 = arith.constant 0 : i32
    %c0_i32_2 = arith.constant 0 : i32
    return %arg0, %c0_i32, %c0_i32_0, %c0_i32_1 : i32, i32, i32, i32
  }
}

</mosaic_0001>

<llo_original>
// kernel: tpu_custom_call.1
$region0: #{tpu_custom_call.1}
  #allocation0 [shape = 'u32[]', space=smem, size = 0x4, offset = 0x4, fixed_abs, tag = 'smem constant byte address 0x4 - core index']
  #allocation1 [shape = 'u32[72,128]{1,0:T(1,128)}', space=vmem, size = 0x9000, scoped, tag = 'internal scratch']
  %s0 = inlined_call_operand.hbm [shape: f32[8,512], index: 0, kind: input, shape index: {}]
  %s1 = inlined_call_operand.hbm [shape: f32[1,512], index: 1, kind: input, shape index: {}]
  %s2 = inlined_call_operand.hbm [shape: f32[1,5,8,128], index: 2, kind: output, shape index: {}]
  %s3 = sld [smem:[#allocation0]]
  $region30: #{tpu_custom_call.1} parent=0
    _
  %s5 = ssub.s32 1, %s3
  %s6 = scalar_select 0, %s5, %s3
  $region1: #{tpu_custom_call.1} parent=0
    #allocation2 [shape = 'u8[16384]{0}', space=vmem, size = 0x4000, scoped, tag = 'input window, operand 0, single buffered']
    #allocation3 [shape = 's32[1]{0}', space=sflag, size = 0x4, scoped, tag = 'scoped memory for tpu_custom_call.1']
    #allocation4 [shape = 's32[1]{0}', space=sflag, size = 0x4, scoped, tag = 'scoped memory for tpu_custom_call.1']
    #allocation5 [shape = 'u8[16384]{0}', space=vmem, size = 0x4000, scoped, tag = 'input window, operand 1, single buffered']
    #allocation6 [shape = 's32[1]{0}', space=sflag, size = 0x4, scoped, tag = 'scoped memory for tpu_custom_call.1']
    #allocation7 [shape = 'u8[20480]{0}', space=vmem, size = 0x5000, scoped, tag = 'output window, operand 0, single buffered']
    %7 = vsyncpa [#allocation3], 0
    %8 = vsyncpa [#allocation6], 0
    %9 = vsyncpa [#allocation4], 0
    // Predicated region
    $region2: #{tpu_custom_call.1} parent=1 // pred_check
      _
    $region3: #{tpu_custom_call.1} parent=1 // pred_check_branch
      %11 = sbr.rel (0) target = $region5
    $region4: #{tpu_custom_call.1} parent=1 // pred_region
      %s12 = sadd.s32 0, 0
      %14 = vsyncadd [#allocation3], 0
      %s15 = smul.addr %s12, 4
      %s16 = smul.addr %s15, 8
      %s17 = scalar_lea.hbm %s0, %s16
      %s19 = sshll.u32 %s17, 4
      %s20 = int_to_ptr.hbm [resolvable:$true] %s19
      %s21 = sshll.u32 [#allocation2], 4
      %s22 = int_to_ptr.vmem [resolvable:$true] %s21
      %24 = dma.hbm_to_vmem [thread:$0]  %s20, 512, %s22, [#allocation3]
    $region5: #{tpu_custom_call.1} parent=1 // pred_fallthru
      _
    // Predicated region
    $region6: #{tpu_custom_call.1} parent=1 // pred_check
      _
    $region7: #{tpu_custom_call.1} parent=1 // pred_check_branch
      %26 = sbr.rel (0) target = $region9
    $region8: #{tpu_custom_call.1} parent=1 // pred_region
      %s27 = sadd.s32 0, 0
      %s28 = smul.u32 8, %s27
      %s29 = ssub.s32 1, %s28
      %s30 = smul.u32 %s29, 4
      %s31 = ssub.s32 32, %s30
      %s32 = sshll.u32 %s31, 4
      %33 = vsyncadd [#allocation6], %s32
      %p34 = scmp.ne.s32.totalorder 0, %s30
      %s35 = smul.addr %s28, 4
      %s36 = scalar_lea.hbm %s1, %s35
      %s37 = smul.u32 4, %s29
      %s38 = sshll.u32 %s36, 4
      %s39 = int_to_ptr.hbm [resolvable:$true] %s38
      %s40 = sshll.u32 [#allocation5], 4
      %s41 = int_to_ptr.vmem [resolvable:$true] %s40
      %s42 = sshll.u32 %s37, 4
      %46 = dma.hbm_to_vmem [thread:$0]  (%p34), %s39, %s42, %s41, [#allocation6], 64, 64, 4
    $region9: #{tpu_custom_call.1} parent=1 // pred_fallthru
      _
    // Predicated region
    $region10: #{tpu_custom_call.1} parent=1 // pred_check
      _
    $region11: #{tpu_custom_call.1} parent=1 // pred_check_branch
      %48 = sbr.rel (0) target = $region13
    $region12: #{tpu_custom_call.1} parent=1 // pred_region
      %50 = dma.done [#allocation3], 512
    $region13: #{tpu_custom_call.1} parent=1 // pred_fallthru
      _
    // Predicated region
    $region14: #{tpu_custom_call.1} parent=1 // pred_check
      _
    $region15: #{tpu_custom_call.1} parent=1 // pred_check_branch
      %52 = sbr.rel (0) target = $region17
    $region16: #{tpu_custom_call.1} parent=1 // pred_region
      %54 = dma.done [#allocation6], 512
    $region17: #{tpu_custom_call.1} parent=1 // pred_fallthru
      _
    %s55 = sadd.s32 0, 0
    %s56 = sadd.s32 0, 0
    %s57 = smul.u32 8, %s56
    %s58 = ssub.s32 1, %s57
    %s59 = smul.u32 %s58, 4
    %p60 = scmp.eq.s32.totalorder 0, 0
    // Predicated region
    $region18: #{tpu_custom_call.1} parent=1 // pred_check
      %p61 = pneg %p60
    $region19: #{tpu_custom_call.1} parent=1 // pred_check_branch
      %63 = sbr.rel (%p61) target = $region21
    $region20: #{tpu_custom_call.1} parent=1 // pred_region
      %64 = vst [vmem:[#allocation7] sm:$0xff] 0.0
      %65 = vst [vmem:[#allocation7 + $0x8] sm:$0xff] 0.0
      %66 = vst [vmem:[#allocation7 + $0x10] sm:$0xff] 0.0
      %67 = vst [vmem:[#allocation7 + $0x18] sm:$0xff] 0.0
      %68 = vst [vmem:[#allocation7 + $0x20] sm:$0xff] 0.0
    $region21: #{tpu_custom_call.1} parent=1 // pred_fallthru
      _
    %s69 = smul.u32 0, 4
    %s70 = smul.addr %s69, 8
    %s71 = scalar_lea.vmem [#allocation2], %s70
    %v72 = vld [vmem:[%s71] sm:$0xff]
    %v73 = vld [vmem:[%s71 + $0x8] sm:$0xff]
    %v74 = vld [vmem:[%s71 + $0x10] sm:$0xff]
    %v75 = vld [vmem:[%s71 + $0x18] sm:$0xff]
    %s76 = smul.u32 0, 4
    %s77 = scalar_lea.vmem [#allocation5], %s76
    %v78 = vld [vmem:[%s77] sm:$0xf]
    %v79 = vld [vmem:[%s77 + $0x4] sm:$0xf]
    %v80 = vld [vmem:[%s77 + $0x8] sm:$0xf]
    %v81 = vld [vmem:[%s77 + $0xc] sm:$0xf]
    %v82 = vld [vmem:[%s77 + $0x10] sm:$0xf]
    %v83 = vld [vmem:[%s77 + $0x14] sm:$0xf]
    %v84 = vld [vmem:[%s77 + $0x18] sm:$0xf]
    %v85 = vld [vmem:[%s77 + $0x1c] sm:$0xf]
    %v86 = vmax.f32 %v72, 0.0
    %v87 = vmax.f32 %v73, 0.0
    %v88 = vmax.f32 %v74, 0.0
    %v89 = vmax.f32 %v75, 0.0
    %v90 = vand.u32 2147483647, %v72
    %v91 = vand.u32 2147483647, %v73
    %v92 = vand.u32 2147483647, %v74
    %v93 = vand.u32 2147483647, %v75
    %v94 = vadd.f32 %v86, 0.0
    %v95 = vadd.f32 %v94, %v87
    %v96 = vadd.f32 %v95, %v88
    %v97 = vadd.f32 %v96, %v89
    %vm98 = vcmp.gt.f32.partialorder %v78, -0.61903924
    %vm99 = vcmp.gt.f32.partialorder %v79, -0.61903924
    %vm100 = vcmp.gt.f32.partialorder %v80, -0.61903924
    %vm101 = vcmp.gt.f32.partialorder %v81, -0.61903924
    %vm102 = vcmp.gt.f32.partialorder %v82, -0.61903924
    %vm103 = vcmp.gt.f32.partialorder %v83, -0.61903924
    %vm104 = vcmp.gt.f32.partialorder %v84, -0.61903924
    %vm105 = vcmp.gt.f32.partialorder %v85, -0.61903924
    %v107 = vrot.slane %v86, 1
    %v108 = vrot.slane %v86, 2
    %v109 = vrot.slane %v86, 3
    %v110 = vrot.slane %v86, 4
    %v111 = vrot.slane %v86, 5
    %v112 = vrot.slane %v86, 6
    %v113 = vrot.slane %v86, 7
    %v121 = vsel %vm98, %v86, 0.0
    %v122 = vsel %vm99, %v107, 0.0
    %v123 = vsel %vm100, %v108, 0.0
    %v124 = vsel %vm101, %v109, 0.0
    %v125 = vsel %vm102, %v110, 0.0
    %v126 = vsel %vm103, %v111, 0.0
    %v127 = vsel %vm104, %v112, 0.0
    %v128 = vsel %vm105, %v113, 0.0
    %v129 = vadd.f32 %v121, 0.0
    %v130 = vadd.f32 %v122, 0.0
    %v131 = vadd.f32 %v123, 0.0
    %v132 = vadd.f32 %v124, 0.0
    %v133 = vadd.f32 %v125, 0.0
    %v134 = vadd.f32 %v126, 0.0
    %v135 = vadd.f32 %v127, 0.0
    %v136 = vadd.f32 %v128, 0.0
    %v138 = vrot.slane %v90, 1
    %v139 = vrot.slane %v90, 2
    %v140 = vrot.slane %v90, 3
    %v141 = vrot.slane %v90, 4
    %v142 = vrot.slane %v90, 5
    %v143 = vrot.slane %v90, 6
    %v144 = vrot.slane %v90, 7
    %v152 = vsel %vm98, %v90, 0.0
    %v153 = vsel %vm99, %v138, 0.0
    %v154 = vsel %vm100, %v139, 0.0
    %v155 = vsel %vm101, %v140, 0.0
    %v156 = vsel %vm102, %v141, 0.0
    %v157 = vsel %vm103, %v142, 0.0
    %v158 = vsel %vm104, %v143, 0.0
    %v159 = vsel %vm105, %v144, 0.0
    %v160 = vadd.f32 %v152, 0.0
    %v161 = vadd.f32 %v153, 0.0
    %v162 = vadd.f32 %v154, 0.0
    %v163 = vadd.f32 %v155, 0.0
    %v164 = vadd.f32 %v156, 0.0
    %v165 = vadd.f32 %v157, 0.0
    %v166 = vadd.f32 %v158, 0.0
    %v167 = vadd.f32 %v159, 0.0
    %v168 = vsel %vm98, 1, 0
    %v169 = vsel %vm99, 1, 0
    %v170 = vsel %vm100, 1, 0
    %v171 = vsel %vm101, 1, 0
    %v172 = vsel %vm102, 1, 0
    %v173 = vsel %vm103, 1, 0
    %v174 = vsel %vm104, 1, 0
    %v175 = vsel %vm105, 1, 0
    %v176 = vrot.slane %v168, 1
    %v177 = vrot.slane %v169, 1
    %v178 = vrot.slane %v170, 1
    %v179 = vrot.slane %v171, 1
    %v180 = vrot.slane %v172, 1
    %v181 = vrot.slane %v173, 1
    %v182 = vrot.slane %v174, 1
    %v183 = vrot.slane %v175, 1
    %vm184 = vcmp.ne.s32.totalorder %v176, 0
    %vm185 = vcmp.ne.s32.totalorder %v177, 0
    %vm186 = vcmp.ne.s32.totalorder %v178, 0
    %vm187 = vcmp.ne.s32.totalorder %v179, 0
    %vm188 = vcmp.ne.s32.totalorder %v180, 0
    %vm189 = vcmp.ne.s32.totalorder %v181, 0
    %vm190 = vcmp.ne.s32.totalorder %v182, 0
    %vm191 = vcmp.ne.s32.totalorder %v183, 0
    %v193 = vrot.slane %v87, 1
    %v194 = vrot.slane %v87, 2
    %v195 = vrot.slane %v87, 3
    %v196 = vrot.slane %v87, 4
    %v197 = vrot.slane %v87, 5
    %v198 = vrot.slane %v87, 6
    %v199 = vrot.slane %v87, 7
    %v207 = vsel %vm184, %v87, 0.0
    %v208 = vsel %vm185, %v193, 0.0
    %v209 = vsel %vm186, %v194, 0.0
    %v210 = vsel %vm187, %v195, 0.0
    %v211 = vsel %vm188, %v196, 0.0
    %v212 = vsel %vm189, %v197, 0.0
    %v213 = vsel %vm190, %v198, 0.0
    %v214 = vsel %vm191, %v199, 0.0
    %v215 = vadd.f32 %v129, %v207
    %v216 = vadd.f32 %v130, %v208
    %v217 = vadd.f32 %v131, %v209
    %v218 = vadd.f32 %v132, %v210
    %v219 = vadd.f32 %v133, %v211
    %v220 = vadd.f32 %v134, %v212
    %v221 = vadd.f32 %v135, %v213
    %v222 = vadd.f32 %v136, %v214
    %v224 = vrot.slane %v91, 1
    %v225 = vrot.slane %v91, 2
    %v226 = vrot.slane %v91, 3
    %v227 = vrot.slane %v91, 4
    %v228 = vrot.slane %v91, 5
    %v229 = vrot.slane %v91, 6
    %v230 = vrot.slane %v91, 7
    %v238 = vsel %vm184, %v91, 0.0
    %v239 = vsel %vm185, %v224, 0.0
    %v240 = vsel %vm186, %v225, 0.0
    %v241 = vsel %vm187, %v226, 0.0
    %v242 = vsel %vm188, %v227, 0.0
    %v243 = vsel %vm189, %v228, 0.0
    %v244 = vsel %vm190, %v229, 0.0
    %v245 = vsel %vm191, %v230, 0.0
    %v246 = vadd.f32 %v160, %v238
    %v247 = vadd.f32 %v161, %v239
    %v248 = vadd.f32 %v162, %v240
    %v249 = vadd.f32 %v163, %v241
    %v250 = vadd.f32 %v164, %v242
    %v251 = vadd.f32 %v165, %v243
    %v252 = vadd.f32 %v166, %v244
    %v253 = vadd.f32 %v167, %v245
    %v254 = vrot.slane %v168, 2
    %v255 = vrot.slane %v169, 2
    %v256 = vrot.slane %v170, 2
    %v257 = vrot.slane %v171, 2
    %v258 = vrot.slane %v172, 2
    %v259 = vrot.slane %v173, 2
    %v260 = vrot.slane %v174, 2
    %v261 = vrot.slane %v175, 2
    %vm262 = vcmp.ne.s32.totalorder %v254, 0
    %vm263 = vcmp.ne.s32.totalorder %v255, 0
    %vm264 = vcmp.ne.s32.totalorder %v256, 0
    %vm265 = vcmp.ne.s32.totalorder %v257, 0
    %vm266 = vcmp.ne.s32.totalorder %v258, 0
    %vm267 = vcmp.ne.s32.totalorder %v259, 0
    %vm268 = vcmp.ne.s32.totalorder %v260, 0
    %vm269 = vcmp.ne.s32.totalorder %v261, 0
    %v271 = vrot.slane %v88, 1
    %v272 = vrot.slane %v88, 2
    %v273 = vrot.slane %v88, 3
    %v274 = vrot.slane %v88, 4
    %v275 = vrot.slane %v88, 5
    %v276 = vrot.slane %v88, 6
    %v277 = vrot.slane %v88, 7
    %v285 = vsel %vm262, %v88, 0.0
    %v286 = vsel %vm263, %v271, 0.0
    %v287 = vsel %vm264, %v272, 0.0
    %v288 = vsel %vm265, %v273, 0.0
    %v289 = vsel %vm266, %v274, 0.0
    %v290 = vsel %vm267, %v275, 0.0
    %v291 = vsel %vm268, %v276, 0.0
    %v292 = vsel %vm269, %v277, 0.0
    %v293 = vadd.f32 %v215, %v285
    %v294 = vadd.f32 %v216, %v286
    %v295 = vadd.f32 %v217, %v287
    %v296 = vadd.f32 %v218, %v288
    %v297 = vadd.f32 %v219, %v289
    %v298 = vadd.f32 %v220, %v290
    %v299 = vadd.f32 %v221, %v291
    %v300 = vadd.f32 %v222, %v292
    %v302 = vrot.slane %v92, 1
    %v303 = vrot.slane %v92, 2
    %v304 = vrot.slane %v92, 3
    %v305 = vrot.slane %v92, 4
    %v306 = vrot.slane %v92, 5
    %v307 = vrot.slane %v92, 6
    %v308 = vrot.slane %v92, 7
    %v316 = vsel %vm262, %v92, 0.0
    %v317 = vsel %vm263, %v302, 0.0
    %v318 = vsel %vm264, %v303, 0.0
    %v319 = vsel %vm265, %v304, 0.0
    %v320 = vsel %vm266, %v305, 0.0
    %v321 = vsel %vm267, %v306, 0.0
    %v322 = vsel %vm268, %v307, 0.0
    %v323 = vsel %vm269, %v308, 0.0
    %v324 = vadd.f32 %v246, %v316
    %v325 = vadd.f32 %v247, %v317
    %v326 = vadd.f32 %v248, %v318
    %v327 = vadd.f32 %v249, %v319
    %v328 = vadd.f32 %v250, %v320
    %v329 = vadd.f32 %v251, %v321
    %v330 = vadd.f32 %v252, %v322
    %v331 = vadd.f32 %v253, %v323
    %v332 = vrot.slane %v168, 3
    %v333 = vrot.slane %v169, 3
    %v334 = vrot.slane %v170, 3
    %v335 = vrot.slane %v171, 3
    %v336 = vrot.slane %v172, 3
    %v337 = vrot.slane %v173, 3
    %v338 = vrot.slane %v174, 3
    %v339 = vrot.slane %v175, 3
    %vm340 = vcmp.ne.s32.totalorder %v332, 0
    %vm341 = vcmp.ne.s32.totalorder %v333, 0
    %vm342 = vcmp.ne.s32.totalorder %v334, 0
    %vm343 = vcmp.ne.s32.totalorder %v335, 0
    %vm344 = vcmp.ne.s32.totalorder %v336, 0
    %vm345 = vcmp.ne.s32.totalorder %v337, 0
    %vm346 = vcmp.ne.s32.totalorder %v338, 0
    %vm347 = vcmp.ne.s32.totalorder %v339, 0
    %v349 = vrot.slane %v89, 1
    %v350 = vrot.slane %v89, 2
    %v351 = vrot.slane %v89, 3
    %v352 = vrot.slane %v89, 4
    %v353 = vrot.slane %v89, 5
    %v354 = vrot.slane %v89, 6
    %v355 = vrot.slane %v89, 7
    %v363 = vsel %vm340, %v89, 0.0
    %v364 = vsel %vm341, %v349, 0.0
    %v365 = vsel %vm342, %v350, 0.0
    %v366 = vsel %vm343, %v351, 0.0
    %v367 = vsel %vm344, %v352, 0.0
    %v368 = vsel %vm345, %v353, 0.0
    %v369 = vsel %vm346, %v354, 0.0
    %v370 = vsel %vm347, %v355, 0.0
    %v371 = vadd.f32 %v293, %v363
    %v372 = vadd.f32 %v294, %v364
    %v373 = vadd.f32 %v295, %v365
    %v374 = vadd.f32 %v296, %v366
    %v375 = vadd.f32 %v297, %v367
    %v376 = vadd.f32 %v298, %v368
    %v377 = vadd.f32 %v299, %v369
    %v378 = vadd.f32 %v300, %v370
    %v380 = vrot.slane %v93, 1
    %v381 = vrot.slane %v93, 2
    %v382 = vrot.slane %v93, 3
    %v383 = vrot.slane %v93, 4
    %v384 = vrot.slane %v93, 5
    %v385 = vrot.slane %v93, 6
    %v386 = vrot.slane %v93, 7
    %v394 = vsel %vm340, %v93, 0.0
    %v395 = vsel %vm341, %v380, 0.0
    %v396 = vsel %vm342, %v381, 0.0
    %v397 = vsel %vm343, %v382, 0.0
    %v398 = vsel %vm344, %v383, 0.0
    %v399 = vsel %vm345, %v384, 0.0
    %v400 = vsel %vm346, %v385, 0.0
    %v401 = vsel %vm347, %v386, 0.0
    %v402 = vadd.f32 %v324, %v394
    %v403 = vadd.f32 %v325, %v395
    %v404 = vadd.f32 %v326, %v396
    %v405 = vadd.f32 %v327, %v397
    %v406 = vadd.f32 %v328, %v398
    %v407 = vadd.f32 %v329, %v399
    %v408 = vadd.f32 %v330, %v400
    %v409 = vadd.f32 %v331, %v401
    %vm410 = vcmp.gt.f32.partialorder %v78, 0.4054651
    %vm411 = vcmp.gt.f32.partialorder %v79, 0.4054651
    %vm412 = vcmp.gt.f32.partialorder %v80, 0.4054651
    %vm413 = vcmp.gt.f32.partialorder %v81, 0.4054651
    %vm414 = vcmp.gt.f32.partialorder %v82, 0.4054651
    %vm415 = vcmp.gt.f32.partialorder %v83, 0.4054651
    %vm416 = vcmp.gt.f32.partialorder %v84, 0.4054651
    %vm417 = vcmp.gt.f32.partialorder %v85, 0.4054651
    %v418 = vsel %vm410, %v86, 0.0
    %v419 = vsel %vm411, %v107, 0.0
    %v420 = vsel %vm412, %v108, 0.0
    %v421 = vsel %vm413, %v109, 0.0
    %v422 = vsel %vm414, %v110, 0.0
    %v423 = vsel %vm415, %v111, 0.0
    %v424 = vsel %vm416, %v112, 0.0
    %v425 = vsel %vm417, %v113, 0.0
    %v426 = vadd.f32 %v418, 0.0
    %v427 = vadd.f32 %v419, 0.0
    %v428 = vadd.f32 %v420, 0.0
    %v429 = vadd.f32 %v421, 0.0
    %v430 = vadd.f32 %v422, 0.0
    %v431 = vadd.f32 %v423, 0.0
    %v432 = vadd.f32 %v424, 0.0
    %v433 = vadd.f32 %v425, 0.0
    %v434 = vsel %vm410, %v90, 0.0
    %v435 = vsel %vm411, %v138, 0.0
    %v436 = vsel %vm412, %v139, 0.0
    %v437 = vsel %vm413, %v140, 0.0
    %v438 = vsel %vm414, %v141, 0.0
    %v439 = vsel %vm415, %v142, 0.0
    %v440 = vsel %vm416, %v143, 0.0
    %v441 = vsel %vm417, %v144, 0.0
    %v442 = vadd.f32 %v434, 0.0
    %v443 = vadd.f32 %v435, 0.0
    %v444 = vadd.f32 %v436, 0.0
    %v445 = vadd.f32 %v437, 0.0
    %v446 = vadd.f32 %v438, 0.0
    %v447 = vadd.f32 %v439, 0.0
    %v448 = vadd.f32 %v440, 0.0
    %v449 = vadd.f32 %v441, 0.0
    %v450 = vsel %vm410, 1, 0
    %v451 = vsel %vm411, 1, 0
    %v452 = vsel %vm412, 1, 0
    %v453 = vsel %vm413, 1, 0
    %v454 = vsel %vm414, 1, 0
    %v455 = vsel %vm415, 1, 0
    %v456 = vsel %vm416, 1, 0
    %v457 = vsel %vm417, 1, 0
    %v458 = vrot.slane %v450, 1
    %v459 = vrot.slane %v451, 1
    %v460 = vrot.slane %v452, 1
    %v461 = vrot.slane %v453, 1
    %v462 = vrot.slane %v454, 1
    %v463 = vrot.slane %v455, 1
    %v464 = vrot.slane %v456, 1
    %v465 = vrot.slane %v457, 1
    %vm466 = vcmp.ne.s32.totalorder %v458, 0
    %vm467 = vcmp.ne.s32.totalorder %v459, 0
    %vm468 = vcmp.ne.s32.totalorder %v460, 0
    %vm469 = vcmp.ne.s32.totalorder %v461, 0
    %vm470 = vcmp.ne.s32.totalorder %v462, 0
    %vm471 = vcmp.ne.s32.totalorder %v463, 0
    %vm472 = vcmp.ne.s32.totalorder %v464, 0
    %vm473 = vcmp.ne.s32.totalorder %v465, 0
    %v474 = vsel %vm466, %v87, 0.0
    %v475 = vsel %vm467, %v193, 0.0
    %v476 = vsel %vm468, %v194, 0.0
    %v477 = vsel %vm469, %v195, 0.0
    %v478 = vsel %vm470, %v196, 0.0
    %v479 = vsel %vm471, %v197, 0.0
    %v480 = vsel %vm472, %v198, 0.0
    %v481 = vsel %vm473, %v199, 0.0
    %v482 = vadd.f32 %v426, %v474
    %v483 = vadd.f32 %v427, %v475
    %v484 = vadd.f32 %v428, %v476
    %v485 = vadd.f32 %v429, %v477
    %v486 = vadd.f32 %v430, %v478
    %v487 = vadd.f32 %v431, %v479
    %v488 = vadd.f32 %v432, %v480
    %v489 = vadd.f32 %v433, %v481
    %v490 = vsel %vm466, %v91, 0.0
    %v491 = vsel %vm467, %v224, 0.0
    %v492 = vsel %vm468, %v225, 0.0
    %v493 = vsel %vm469, %v226, 0.0
    %v494 = vsel %vm470, %v227, 0.0
    %v495 = vsel %vm471, %v228, 0.0
    %v496 = vsel %vm472, %v229, 0.0
    %v497 = vsel %vm473, %v230, 0.0
    %v498 = vadd.f32 %v442, %v490
    %v499 = vadd.f32 %v443, %v491
    %v500 = vadd.f32 %v444, %v492
    %v501 = vadd.f32 %v445, %v493
    %v502 = vadd.f32 %v446, %v494
    %v503 = vadd.f32 %v447, %v495
    %v504 = vadd.f32 %v448, %v496
    %v505 = vadd.f32 %v449, %v497
    %v506 = vrot.slane %v450, 2
    %v507 = vrot.slane %v451, 2
    %v508 = vrot.slane %v452, 2
    %v509 = vrot.slane %v453, 2
    %v510 = vrot.slane %v454, 2
    %v511 = vrot.slane %v455, 2
    %v512 = vrot.slane %v456, 2
    %v513 = vrot.slane %v457, 2
    %vm514 = vcmp.ne.s32.totalorder %v506, 0
    %vm515 = vcmp.ne.s32.totalorder %v507, 0
    %vm516 = vcmp.ne.s32.totalorder %v508, 0
    %vm517 = vcmp.ne.s32.totalorder %v509, 0
    %vm518 = vcmp.ne.s32.totalorder %v510, 0
    %vm519 = vcmp.ne.s32.totalorder %v511, 0
    %vm520 = vcmp.ne.s32.totalorder %v512, 0
    %vm521 = vcmp.ne.s32.totalorder %v513, 0
    %v522 = vsel %vm514, %v88, 0.0
    %v523 = vsel %vm515, %v271, 0.0
    %v524 = vsel %vm516, %v272, 0.0
    %v525 = vsel %vm517, %v273, 0.0
    %v526 = vsel %vm518, %v274, 0.0
    %v527 = vsel %vm519, %v275, 0.0
    %v528 = vsel %vm520, %v276, 0.0
    %v529 = vsel %vm521, %v277, 0.0
    %v530 = vadd.f32 %v482, %v522
    %v531 = vadd.f32 %v483, %v523
    %v532 = vadd.f32 %v484, %v524
    %v533 = vadd.f32 %v485, %v525
    %v534 = vadd.f32 %v486, %v526
    %v535 = vadd.f32 %v487, %v527
    %v536 = vadd.f32 %v488, %v528
    %v537 = vadd.f32 %v489, %v529
    %v538 = vsel %vm514, %v92, 0.0
    %v539 = vsel %vm515, %v302, 0.0
    %v540 = vsel %vm516, %v303, 0.0
    %v541 = vsel %vm517, %v304, 0.0
    %v542 = vsel %vm518, %v305, 0.0
    %v543 = vsel %vm519, %v306, 0.0
    %v544 = vsel %vm520, %v307, 0.0
    %v545 = vsel %vm521, %v308, 0.0
    %v546 = vadd.f32 %v498, %v538
    %v547 = vadd.f32 %v499, %v539
    %v548 = vadd.f32 %v500, %v540
    %v549 = vadd.f32 %v501, %v541
    %v550 = vadd.f32 %v502, %v542
    %v551 = vadd.f32 %v503, %v543
    %v552 = vadd.f32 %v504, %v544
    %v553 = vadd.f32 %v505, %v545
    %v554 = vrot.slane %v450, 3
    %v555 = vrot.slane %v451, 3
    %v556 = vrot.slane %v452, 3
    %v557 = vrot.slane %v453, 3
    %v558 = vrot.slane %v454, 3
    %v559 = vrot.slane %v455, 3
    %v560 = vrot.slane %v456, 3
    %v561 = vrot.slane %v457, 3
    %vm562 = vcmp.ne.s32.totalorder %v554, 0
    %vm563 = vcmp.ne.s32.totalorder %v555, 0
    %vm564 = vcmp.ne.s32.totalorder %v556, 0
    %vm565 = vcmp.ne.s32.totalorder %v557, 0
    %vm566 = vcmp.ne.s32.totalorder %v558, 0
    %vm567 = vcmp.ne.s32.totalorder %v559, 0
    %vm568 = vcmp.ne.s32.totalorder %v560, 0
    %vm569 = vcmp.ne.s32.totalorder %v561, 0
    %v570 = vsel %vm562, %v89, 0.0
    %v571 = vsel %vm563, %v349, 0.0
    %v572 = vsel %vm564, %v350, 0.0
    %v573 = vsel %vm565, %v351, 0.0
    %v574 = vsel %vm566, %v352, 0.0
    %v575 = vsel %vm567, %v353, 0.0
    %v576 = vsel %vm568, %v354, 0.0
    %v577 = vsel %vm569, %v355, 0.0
    %v578 = vadd.f32 %v530, %v570
    %v579 = vadd.f32 %v531, %v571
    %v580 = vadd.f32 %v532, %v572
    %v581 = vadd.f32 %v533, %v573
    %v582 = vadd.f32 %v534, %v574
    %v583 = vadd.f32 %v535, %v575
    %v584 = vadd.f32 %v536, %v576
    %v585 = vadd.f32 %v537, %v577
    %v586 = vsel %vm562, %v93, 0.0
    %v587 = vsel %vm563, %v380, 0.0
    %v588 = vsel %vm564, %v381, 0.0
    %v589 = vsel %vm565, %v382, 0.0
    %v590 = vsel %vm566, %v383, 0.0
    %v591 = vsel %vm567, %v384, 0.0
    %v592 = vsel %vm568, %v385, 0.0
    %v593 = vsel %vm569, %v386, 0.0
    %v594 = vadd.f32 %v546, %v586
    %v595 = vadd.f32 %v547, %v587
    %v596 = vadd.f32 %v548, %v588
    %v597 = vadd.f32 %v549, %v589
    %v598 = vadd.f32 %v550, %v590
    %v599 = vadd.f32 %v551, %v591
    %v600 = vadd.f32 %v552, %v592
    %v601 = vadd.f32 %v553, %v593
    %v602 = vld [vmem:[#allocation7] sm:$0xff]
    %611 = vst [vmem:[#allocation1] ss:$9 sm:$0xff] %v371
    %s612 = scalar_lea.vmem [#allocation1], 1
    %613 = vst [vmem:[%s612] ss:$9 sm:$0xff] %v372
    %s614 = scalar_lea.vmem [#allocation1], 2
    %615 = vst [vmem:[%s614] ss:$9 sm:$0xff] %v373
    %s616 = scalar_lea.vmem [#allocation1], 3
    %617 = vst [vmem:[%s616] ss:$9 sm:$0xff] %v374
    %s618 = scalar_lea.vmem [#allocation1], 4
    %619 = vst [vmem:[%s618] ss:$9 sm:$0xff] %v375
    %s620 = scalar_lea.vmem [#allocation1], 5
    %621 = vst [vmem:[%s620] ss:$9 sm:$0xff] %v376
    %s622 = scalar_lea.vmem [#allocation1], 6
    %623 = vst [vmem:[%s622] ss:$9 sm:$0xff] %v377
    %s624 = scalar_lea.vmem [#allocation1], 7
    %625 = vst [vmem:[%s624] ss:$9 sm:$0xff] %v378
    %v626 = vld [vmem:[#allocation1] sm:$0xff]
    %v628 = vadd.f32 %v602, %v626
    %629 = vst [vmem:[#allocation7] sm:$0xff] %v628
    %s630 = scalar_lea.vmem [#allocation7], 8
    %v631 = vld [vmem:[%s630] sm:$0xff]
    %640 = vst [vmem:[#allocation1] ss:$9 sm:$0xff] %v578
    %s641 = scalar_lea.vmem [#allocation1], 1
    %642 = vst [vmem:[%s641] ss:$9 sm:$0xff] %v579
    %s643 = scalar_lea.vmem [#allocation1], 2
    %644 = vst [vmem:[%s643] ss:$9 sm:$0xff] %v580
    %s645 = scalar_lea.vmem [#allocation1], 3
    %646 = vst [vmem:[%s645] ss:$9 sm:$0xff] %v581
    %s647 = scalar_lea.vmem [#allocation1], 4
    %648 = vst [vmem:[%s647] ss:$9 sm:$0xff] %v582
    %s649 = scalar_lea.vmem [#allocation1], 5
    %650 = vst [vmem:[%s649] ss:$9 sm:$0xff] %v583
    %s651 = scalar_lea.vmem [#allocation1], 6
    %652 = vst [vmem:[%s651] ss:$9 sm:$0xff] %v584
    %s653 = scalar_lea.vmem [#allocation1], 7
    %654 = vst [vmem:[%s653] ss:$9 sm:$0xff] %v585
    %v655 = vld [vmem:[#allocation1] sm:$0xff]
    %v657 = vadd.f32 %v631, %v655
    %658 = vst [vmem:[%s630] sm:$0xff] %v657
    %s659 = scalar_lea.vmem [#allocation7], 16
    %v660 = vld [vmem:[%s659] sm:$0xff]
    %669 = vst [vmem:[#allocation1] ss:$9 sm:$0xff] %v402
    %s670 = scalar_lea.vmem [#allocation1], 1
    %671 = vst [vmem:[%s670] ss:$9 sm:$0xff] %v403
    %s672 = scalar_lea.vmem [#allocation1], 2
    %673 = vst [vmem:[%s672] ss:$9 sm:$0xff] %v404
    %s674 = scalar_lea.vmem [#allocation1], 3
    %675 = vst [vmem:[%s674] ss:$9 sm:$0xff] %v405
    %s676 = scalar_lea.vmem [#allocation1], 4
    %677 = vst [vmem:[%s676] ss:$9 sm:$0xff] %v406
    %s678 = scalar_lea.vmem [#allocation1], 5
    %679 = vst [vmem:[%s678] ss:$9 sm:$0xff] %v407
    %s680 = scalar_lea.vmem [#allocation1], 6
    %681 = vst [vmem:[%s680] ss:$9 sm:$0xff] %v408
    %s682 = scalar_lea.vmem [#allocation1], 7
    %683 = vst [vmem:[%s682] ss:$9 sm:$0xff] %v409
    %v684 = vld [vmem:[#allocation1] sm:$0xff]
    %v686 = vadd.f32 %v660, %v684
    %687 = vst [vmem:[%s659] sm:$0xff] %v686
    %s688 = scalar_lea.vmem [#allocation7], 24
    %v689 = vld [vmem:[%s688] sm:$0xff]
    %698 = vst [vmem:[#allocation1] ss:$9 sm:$0xff] %v594
    %s699 = scalar_lea.vmem [#allocation1], 1
    %700 = vst [vmem:[%s699] ss:$9 sm:$0xff] %v595
    %s701 = scalar_lea.vmem [#allocation1], 2
    %702 = vst [vmem:[%s701] ss:$9 sm:$0xff] %v596
    %s703 = scalar_lea.vmem [#allocation1], 3
    %704 = vst [vmem:[%s703] ss:$9 sm:$0xff] %v597
    %s705 = scalar_lea.vmem [#allocation1], 4
    %706 = vst [vmem:[%s705] ss:$9 sm:$0xff] %v598
    %s707 = scalar_lea.vmem [#allocation1], 5
    %708 = vst [vmem:[%s707] ss:$9 sm:$0xff] %v599
    %s709 = scalar_lea.vmem [#allocation1], 6
    %710 = vst [vmem:[%s709] ss:$9 sm:$0xff] %v600
    %s711 = scalar_lea.vmem [#allocation1], 7
    %712 = vst [vmem:[%s711] ss:$9 sm:$0xff] %v601
    %v713 = vld [vmem:[#allocation1] sm:$0xff]
    %v715 = vadd.f32 %v689, %v713
    %716 = vst [vmem:[%s688] sm:$0xff] %v715
    %s717 = scalar_lea.vmem [#allocation7], 32
    %v718 = vld [vmem:[%s717] sm:$0xff]
    %v719 = vadd.f32 %v718, %v97
    %720 = vst [vmem:[%s717] sm:$0xff] %v719
    // Predicated region
    $region22: #{tpu_custom_call.1} parent=1 // pred_check
      _
    $region23: #{tpu_custom_call.1} parent=1 // pred_check_branch
      %722 = sbr.rel (0) target = $region25
    $region24: #{tpu_custom_call.1} parent=1 // pred_region
      %724 = vsyncadd [#allocation4], 0
      %s725 = sshll.u32 [#allocation7], 4
      %s726 = int_to_ptr.vmem [resolvable:$true] %s725
      %s727 = sshll.u32 %s2, 4
      %s728 = int_to_ptr.hbm [resolvable:$true] %s727
      %733 = dma.vmem_to_hbm [thread:$0]  %s726, 640, %s728, [#allocation4], 128, 128, 8
    $region25: #{tpu_custom_call.1} parent=1 // pred_fallthru
      _
    // Predicated region
    $region26: #{tpu_custom_call.1} parent=1 // pred_check
      _
    $region27: #{tpu_custom_call.1} parent=1 // pred_check_branch
      %735 = sbr.rel (0) target = $region29
    $region28: #{tpu_custom_call.1} parent=1 // pred_region
      %737 = dma.done [#allocation4], 640
    $region29: #{tpu_custom_call.1} parent=1 // pred_fallthru
      _
    %738 = vsyncpa [#allocation3], 1
    %739 = vsyncpa [#allocation6], 1
    %740 = vsyncpa [#allocation4], 1

</llo_original>
